<compile_context>
chip_gen: v7x
topology: tpu7x:2x2x1
jax: 0.10.0
libtpu: 0.0.40
codegen_flags: <defaults>
</compile_context>

<pallas_src>
import jax
import jax.numpy as jnp
from jax import lax
from jax.experimental import pallas as pl
from jax.experimental.pallas import tpu as pltpu

MATMUL_DTYPE = jnp.bfloat16   # MXU operand dtype; accumulation is always float32

# Whole-array, VMEM-resident operand (constant across the grid -> single copy,
# no per-step double buffering).
_WEIGHT_SPEC = pl.BlockSpec(memory_space=pltpu.MemorySpace.VMEM)


# -----------------------------------------------------------------------------
# Generation-aware batch tiling
# -----------------------------------------------------------------------------
def _num_tensorcores():
    """Best-effort TensorCores-per-chip detection (megacore chips: v4/v5p/v7)."""
    try:
        kind = jax.devices()[0].device_kind.lower()
    except Exception:
        return 1
    return 2 if any(tag in kind for tag in ("v4", "v5p", "v7")) else 1


def _resolve_batch_tile(batch, batch_tile):
    if batch_tile is None:
        cores = _num_tensorcores()
        if cores > 1 and batch % cores == 0 and (batch // cores) % 8 == 0:
            batch_tile = batch // cores   # one chunk per TensorCore on megacore chips
        else:
            batch_tile = batch            # single-TC chips: grid=(1,), no step overhead
    assert batch % batch_tile == 0
    return batch_tile


# -----------------------------------------------------------------------------
# Full-width gate activation (one EUP pass for i, f, g, o)
# -----------------------------------------------------------------------------
def _gate_masks(batch_tile, hidden):
    lane = lax.broadcasted_iota(jnp.int32, (batch_tile, 4 * hidden), 1)
    is_g = (lane >= 2 * hidden) & (lane < 3 * hidden)
    scale = jnp.where(is_g, jnp.float32(1.0), jnp.float32(0.5))
    return is_g, scale


def _activate(gates, is_g, scale):
    # sigmoid(x) == 0.5*tanh(0.5*x) + 0.5 ; g gate uses plain tanh(x).
    t = jnp.tanh(gates * scale)
    return jnp.where(is_g, t, 0.5 * t + 0.5)


# -----------------------------------------------------------------------------
# Kernel 1: one StackedLSTMCells.forward step (all layers fused)
# -----------------------------------------------------------------------------
def _make_stacked_cells_kernel(num_layers):
    def kernel(x_ref, h_ref, c_ref, *args):
        w_refs = args[:2 * num_layers]
        h_out_ref, c_out_ref = args[2 * num_layers], args[2 * num_layers + 1]
        bt, hidden = h_ref.shape[1], h_ref.shape[2]
        is_g, scale = _gate_masks(bt, hidden)

        inp = x_ref[...].astype(MATMUL_DTYPE)                    # [Bt, D]
        for l in range(num_layers):                               # static unroll
            w = w_refs[2 * l][...]                                # [(D_l+H), 4H] bf16
            b = w_refs[2 * l + 1][...]                            # [1, 4H] f32 (b_ih+b_hh)
            h_prev = h_ref[l]                                     # [Bt, H] f32
            c_prev = c_ref[l]

            # single fused gate matmul per layer: [inp | h_prev] @ [W_ih; W_hh]
            xh = jnp.concatenate([inp, h_prev.astype(MATMUL_DTYPE)], axis=1)
            gates = jnp.dot(xh, w, preferred_element_type=jnp.float32) + b

            act = _activate(gates, is_g, scale)                   # [Bt, 4H]
            i_g = act[:, 0 * hidden:1 * hidden]                   # PyTorch order i,f,g,o
            f_g = act[:, 1 * hidden:2 * hidden]
            g_g = act[:, 2 * hidden:3 * hidden]
            o_g = act[:, 3 * hidden:4 * hidden]

            c_new = f_g * c_prev + i_g * g_g
            h_new = o_g * jnp.tanh(c_new)

            h_out_ref[l] = h_new
            c_out_ref[l] = c_new
            # TODO(synk): training-mode inter-layer dropout not implemented
            #             (p=0 / eval mode => identity, matching default usage).
            inp = h_new.astype(MATMUL_DTYPE)

    return kernel


def stacked_lstm_cells(x, h, c, layers, *, batch_tile=None, donate_state=False):
    """One fused pallas_call == StackedLSTMCells.forward(input_, (h, c)).

    layers[l] = (w_ih [D_l,4H], w_hh [H,4H], b [1,4H]) pre-transposed, b = b_ih + b_hh,
    gate order i, f, g, o along the 4H axis (torch.nn.LSTMCell convention).
    """
    num_layers, batch, hidden = h.shape
    d_in = x.shape[1]
    bt = _resolve_batch_tile(batch, batch_tile)

    w_args, w_specs = [], []
    for (w_ih, w_hh, b) in layers:
        w_args += [jnp.concatenate([w_ih, w_hh], axis=0).astype(MATMUL_DTYPE),
                   b.astype(jnp.float32)]
        w_specs += [_WEIGHT_SPEC, _WEIGHT_SPEC]

    state_spec = pl.BlockSpec((num_layers, bt, hidden), lambda i: (0, i, 0))
    alias = {1: 0, 2: 1} if donate_state else {}
    return pl.pallas_call(
        _make_stacked_cells_kernel(num_layers),
        out_shape=(jax.ShapeDtypeStruct((num_layers, batch, hidden), jnp.float32),
                   jax.ShapeDtypeStruct((num_layers, batch, hidden), jnp.float32)),
        grid=(batch // bt,),
        in_specs=[pl.BlockSpec((bt, d_in), lambda i: (i, 0)), state_spec, state_spec]
                 + w_specs,
        out_specs=(state_spec, state_spec),
        input_output_aliases=alias,
        compiler_params=pltpu.CompilerParams(dimension_semantics=("parallel",)),
    )(x, h, c, *w_args)


# -----------------------------------------------------------------------------
# Kernel 2: T timesteps of the stacked cells fused into one kernel
#   (recurrence in-kernel, weights resident, layer-0 projection hoisted,
#    time axis streamed in chunks, state carried in VMEM-resident output blocks)
# -----------------------------------------------------------------------------
def _make_stacked_sequence_kernel(num_layers):
    def kernel(xg_ref, h0_ref, c0_ref, whh0_ref, *args):
        n_w = 2 * (num_layers - 1)
        w_refs = args[:n_w]
        h_out_ref, c_out_ref = args[n_w], args[n_w + 1]
        bt, hidden = h_out_ref.shape[1], h_out_ref.shape[2]
        is_g, scale = _gate_masks(bt, hidden)

        # first time chunk: seed the VMEM-resident output state blocks
        @pl.when(pl.program_id(1) == 0)
        def _():
            h_out_ref[...] = h0_ref[...]
            c_out_ref[...] = c0_ref[...]

        h_init = tuple(h_out_ref[l] for l in range(num_layers))
        c_init = tuple(c_out_ref[l] for l in range(num_layers))
        chunk = xg_ref.shape[0]

        def step(t, carry):
            hs, cs = carry
            new_hs, new_cs = [], []
            inp = None
            for l in range(num_layers):
                if l == 0:
                    # layer-0 input projection was hoisted: xg[t] = x_t @ W_ih0 + b0
                    gates = xg_ref[t].astype(jnp.float32) + jnp.dot(
                        hs[0].astype(MATMUL_DTYPE), whh0_ref[...],
                        preferred_element_type=jnp.float32)
                else:
                    # weights are read from their VMEM refs at the use point
                    xh = jnp.concatenate([inp, hs[l].astype(MATMUL_DTYPE)], axis=1)
                    gates = (jnp.dot(xh, w_refs[2 * (l - 1)][...],
                                     preferred_element_type=jnp.float32)
                             + w_refs[2 * (l - 1) + 1][...])
                act = _activate(gates, is_g, scale)
                i_g = act[:, 0 * hidden:1 * hidden]
                f_g = act[:, 1 * hidden:2 * hidden]
                g_g = act[:, 2 * hidden:3 * hidden]
                o_g = act[:, 3 * hidden:4 * hidden]
                c_new = f_g * cs[l] + i_g * g_g
                h_new = o_g * jnp.tanh(c_new)
                new_hs.append(h_new)
                new_cs.append(c_new)
                inp = h_new.astype(MATMUL_DTYPE)
            return tuple(new_hs), tuple(new_cs)

        # unroll=2: scheduler visibility so the next step's weight loads / vmatmul
        # overlap the previous step's EUP/VPU tail.
        hs, cs = lax.fori_loop(0, chunk, step, (h_init, c_init), unroll=2)
        for l in range(num_layers):
            h_out_ref[l] = hs[l]
            c_out_ref[l] = cs[l]

    return kernel


def stacked_lstm_sequence(x_seq, h0, c0, layers, *, batch_tile=None, time_chunk=None):
    """Apply StackedLSTMCells over x_seq [T, B, D]; returns the final (h, c)."""
    num_layers, batch, hidden = h0.shape
    n_steps = x_seq.shape[0]
    bt = _resolve_batch_tile(batch, batch_tile)
    if time_chunk is None:
        time_chunk = n_steps
    assert n_steps % time_chunk == 0

    w_ih0, w_hh0, b0 = layers[0]
    # hoisted layer-0 input projection: one big [T*B, D] @ [D, 4H] matmul,
    # f32 accumulation, stored bf16 (half the HBM round trip / VMEM block).
    xg = (jnp.einsum('tbd,dg->tbg',
                     x_seq.astype(MATMUL_DTYPE), w_ih0.astype(MATMUL_DTYPE),
                     preferred_element_type=jnp.float32)
          + b0.astype(jnp.float32)).astype(MATMUL_DTYPE)            # [T, B, 4H] bf16

    w_args = [w_hh0.astype(MATMUL_DTYPE)]
    w_specs = [_WEIGHT_SPEC]
    for l in range(1, num_layers):
        w_ih, w_hh, b = layers[l]
        w_args += [jnp.concatenate([w_ih, w_hh], axis=0).astype(MATMUL_DTYPE),
                   b.astype(jnp.float32)]
        w_specs += [_WEIGHT_SPEC, _WEIGHT_SPEC]

    state_spec = pl.BlockSpec((num_layers, bt, hidden), lambda i, t: (0, i, 0))
    xg_spec = pl.BlockSpec((time_chunk, bt, 4 * hidden), lambda i, t: (t, i, 0))
    return pl.pallas_call(
        _make_stacked_sequence_kernel(num_layers),
        out_shape=(jax.ShapeDtypeStruct((num_layers, batch, hidden), jnp.float32),
                   jax.ShapeDtypeStruct((num_layers, batch, hidden), jnp.float32)),
        grid=(batch // bt, n_steps // time_chunk),
        in_specs=[xg_spec, state_spec, state_spec] + w_specs,
        out_specs=(state_spec, state_spec),
        compiler_params=pltpu.CompilerParams(
            dimension_semantics=("parallel", "arbitrary")),
    )(xg, h0, c0, *w_args)


# -----------------------------------------------------------------------------
# Pure-JAX float32 reference (matches PyTorch StackedLSTMCells forward, eval mode)
# -----------------------------------------------------------------------------
def stacked_lstm_cells_ref(x, h, c, layers):
    new_h, new_c = [], []
    inp = x
    for l, (w_ih, w_hh, b) in enumerate(layers):
        hidden = w_hh.shape[0]
        gates = inp @ w_ih + h[l] @ w_hh + b
        i_g = jax.nn.sigmoid(gates[:, 0 * hidden:1 * hidden])
        f_g = jax.nn.sigmoid(gates[:, 1 * hidden:2 * hidden])
        g_g = jnp.tanh(gates[:, 2 * hidden:3 * hidden])
        o_g = jax.nn.sigmoid(gates[:, 3 * hidden:4 * hidden])
        c_new = f_g * c[l] + i_g * g_g
        h_new = o_g * jnp.tanh(c_new)
        new_h.append(h_new)
        new_c.append(c_new)
        inp = h_new
    return jnp.stack(new_h, 0), jnp.stack(new_c, 0)


if __name__ == "__main__":
    key = jax.random.PRNGKey(0)
    num_layers, batch, input_size, hidden = 2, 16, 64, 32     # 4H = 128 -> lane dense
    n_steps = 8

    keys = iter(jax.random.split(key, 32))

    def nrm(shape, scale=0.1):
        return scale * jax.random.normal(next(keys), shape, jnp.float32)

    # Weights pre-transposed once to [D, 4H] / [H, 4H]; b = b_ih + b_hh pre-summed.
    # Gate ordering (i, f, g, o) along the 4H axis matches torch.nn.LSTMCell.
    layers = []
    for l in range(num_layers):
        d_in = input_size if l == 0 else hidden
        layers.append((nrm((d_in, 4 * hidden)),
                       nrm((hidden, 4 * hidden)),
                       nrm((1, 4 * hidden))))

    x = nrm((batch, input_size), 1.0)
    h0 = nrm((num_layers, batch, hidden), 0.5)
    c0 = nrm((num_layers, batch, hidden), 0.5)

    # --- single StackedLSTMCells.forward step (the module) -------------------
    h1, c1 = jax.block_until_ready(stacked_lstm_cells(x, h0, c0, layers))
    h1_ref, c1_ref = stacked_lstm_cells_ref(x, h0, c0, layers)
    assert h1.shape == (num_layers, batch, hidden), h1.shape
    assert c1.shape == (num_layers, batch, hidden), c1.shape
    assert jnp.allclose(h1, h1_ref, atol=5e-2, rtol=5e-2)
    assert jnp.allclose(c1, c1_ref, atol=5e-2, rtol=5e-2)

    # --- same step with state aliased in place (decode-loop variant) ---------
    h1b, c1b = jax.block_until_ready(
        stacked_lstm_cells(x, h0 + 0.0, c0 + 0.0, layers, donate_state=True))
    assert jnp.allclose(h1b, h1, atol=1e-6) and jnp.allclose(c1b, c1, atol=1e-6)

    # --- fused T-step recurrence, time axis streamed in chunks ---------------
    x_seq = nrm((n_steps, batch, input_size), 1.0)
    hT, cT = jax.block_until_ready(
        stacked_lstm_sequence(x_seq, h0, c0, layers, time_chunk=4))
    h_r, c_r = h0, c0
    for t in range(n_steps):
        h_r, c_r = stacked_lstm_cells_ref(x_seq[t], h_r, c_r, layers)
    assert jnp.allclose(hT, h_r, atol=5e-2, rtol=5e-2)
    assert jnp.allclose(cT, c_r, atol=5e-2, rtol=5e-2)
    assert bool(jnp.all(jnp.isfinite(hT))) and bool(jnp.all(jnp.isfinite(cT)))

    print("KERNEL_OK")
</pallas_src>

<mosaic_0001>
module attributes {stable_mosaic.version = 11 : i64} {
  func.func @kernel(%arg0: i32, %arg1: memref<16x64xf32, #tpu.memory_space<vmem>>, %arg2: memref<2x16x32xf32, #tpu.memory_space<vmem>>, %arg3: memref<2x16x32xf32, #tpu.memory_space<vmem>>, %arg4: memref<96x128xbf16, #tpu.memory_space<vmem>>, %arg5: memref<1x128xf32, #tpu.memory_space<vmem>>, %arg6: memref<64x128xbf16, #tpu.memory_space<vmem>>, %arg7: memref<1x128xf32, #tpu.memory_space<vmem>>, %arg8: memref<2x16x32xf32, #tpu.memory_space<vmem>>, %arg9: memref<2x16x32xf32, #tpu.memory_space<vmem>>) attributes {dimension_semantics = [#tpu.dimension_semantics<parallel>], iteration_bounds = array<i64: 1>, scalar_prefetch = 0 : i64, scratch_operands = 0 : i64, tpu.core_type = #tpu.core_type<tc>, window_params = [{transform_indices = @transform_0, window_bounds = array<i64: 16, 64>}, {transform_indices = @transform_1, window_bounds = array<i64: 2, 16, 32>}, {transform_indices = @transform_2, window_bounds = array<i64: 2, 16, 32>}, {pipeline_mode = #tpu.pipeline_mode<synchronous>, transform_indices = @transform_3, window_bounds = array<i64: 96, 128>}, {pipeline_mode = #tpu.pipeline_mode<synchronous>, transform_indices = @transform_4, window_bounds = array<i64: 1, 128>}, {pipeline_mode = #tpu.pipeline_mode<synchronous>, transform_indices = @transform_5, window_bounds = array<i64: 64, 128>}, {pipeline_mode = #tpu.pipeline_mode<synchronous>, transform_indices = @transform_6, window_bounds = array<i64: 1, 128>}, {transform_indices = @transform_7, window_bounds = array<i64: 2, 16, 32>}, {transform_indices = @transform_8, window_bounds = array<i64: 2, 16, 32>}]} {
    %0 = tpu.iota {dimensions = array<i32: 1>} : vector<16x128xi32>
    %c64_i32 = arith.constant 64 : i32
    %1 = vector.broadcast %c64_i32 : i32 to vector<16x128xi32>
    %2 = arith.cmpi sge, %0, %1 : vector<16x128xi32>
    %c96_i32 = arith.constant 96 : i32
    %3 = vector.broadcast %c96_i32 : i32 to vector<16x128xi32>
    %4 = arith.cmpi slt, %0, %3 : vector<16x128xi32>
    %5 = arith.andi %2, %4 : vector<16x128xi1>
    %cst = arith.constant 1.000000e+00 : f32
    %cst_0 = arith.constant 5.000000e-01 : f32
    %6 = vector.broadcast %cst : f32 to vector<16x128xf32>
    %7 = vector.broadcast %cst_0 : f32 to vector<16x128xf32>
    %8 = arith.select %5, %6, %7 : vector<16x128xi1>, vector<16x128xf32>
    %c0 = arith.constant 0 : index
    %c0_1 = arith.constant 0 : index
    %9 = vector.load %arg1[%c0, %c0_1] : memref<16x64xf32, #tpu.memory_space<vmem>>, vector<16x64xf32>
    %10 = arith.truncf %9 : vector<16x64xf32> to vector<16x64xbf16>
    %c0_2 = arith.constant 0 : index
    %c0_3 = arith.constant 0 : index
    %11 = vector.load %arg4[%c0_2, %c0_3] : memref<96x128xbf16, #tpu.memory_space<vmem>>, vector<96x128xbf16>
    %c0_4 = arith.constant 0 : index
    %c0_5 = arith.constant 0 : index
    %12 = vector.load %arg5[%c0_4, %c0_5] : memref<1x128xf32, #tpu.memory_space<vmem>>, vector<1x128xf32>
    %c0_6 = arith.constant 0 : index
    %c0_7 = arith.constant 0 : index
    %c0_8 = arith.constant 0 : index
    %13 = vector.load %arg2[%c0_6, %c0_7, %c0_8] : memref<2x16x32xf32, #tpu.memory_space<vmem>>, vector<1x16x32xf32>
    %14 = vector.shape_cast %13 : vector<1x16x32xf32> to vector<16x32xf32>
    %c0_9 = arith.constant 0 : index
    %c0_10 = arith.constant 0 : index
    %c0_11 = arith.constant 0 : index
    %15 = vector.load %arg3[%c0_9, %c0_10, %c0_11] : memref<2x16x32xf32, #tpu.memory_space<vmem>>, vector<1x16x32xf32>
    %16 = vector.shape_cast %15 : vector<1x16x32xf32> to vector<16x32xf32>
    %17 = arith.truncf %14 : vector<16x32xf32> to vector<16x32xbf16>
    %18 = tpu.concatenate %10, %17 in 1 : vector<16x64xbf16>, vector<16x32xbf16> -> vector<16x96xbf16>
    %cst_12 = arith.constant dense<0.000000e+00> : vector<16x128xf32>
    %19 = tpu.matmul %18, %11, %cst_12 {dimension_numbers = #tpu.dot_dimension_numbers<[1], [0], [0], [1], [0, 0, 1, 1], [], []>} : vector<16x96xbf16>, vector<96x128xbf16>, vector<16x128xf32> -> vector<16x128xf32>
    %20 = vector.broadcast %12 : vector<1x128xf32> to vector<16x128xf32>
    %21 = arith.addf %19, %20 : vector<16x128xf32>
    %22 = arith.mulf %21, %8 : vector<16x128xf32>
    %23 = math.tanh %22 : vector<16x128xf32>
    %cst_13 = arith.constant 5.000000e-01 : f32
    %24 = vector.broadcast %cst_13 : f32 to vector<16x128xf32>
    %25 = arith.mulf %24, %23 : vector<16x128xf32>
    %cst_14 = arith.constant 5.000000e-01 : f32
    %26 = vector.broadcast %cst_14 : f32 to vector<16x128xf32>
    %27 = arith.addf %25, %26 : vector<16x128xf32>
    %28 = arith.select %5, %23, %27 : vector<16x128xi1>, vector<16x128xf32>
    %29 = vector.extract_strided_slice %28 {offsets = [0, 0], sizes = [16, 32], strides = [1, 1]} : vector<16x128xf32> to vector<16x32xf32>
    %30 = vector.extract_strided_slice %28 {offsets = [0, 32], sizes = [16, 32], strides = [1, 1]} : vector<16x128xf32> to vector<16x32xf32>
    %31 = vector.extract_strided_slice %28 {offsets = [0, 64], sizes = [16, 32], strides = [1, 1]} : vector<16x128xf32> to vector<16x32xf32>
    %32 = vector.extract_strided_slice %28 {offsets = [0, 96], sizes = [16, 32], strides = [1, 1]} : vector<16x128xf32> to vector<16x32xf32>
    %33 = arith.mulf %30, %16 : vector<16x32xf32>
    %34 = arith.mulf %29, %31 : vector<16x32xf32>
    %35 = arith.addf %33, %34 : vector<16x32xf32>
    %36 = math.tanh %35 : vector<16x32xf32>
    %37 = arith.mulf %32, %36 : vector<16x32xf32>
    %c0_15 = arith.constant 0 : index
    %c0_16 = arith.constant 0 : index
    %c0_17 = arith.constant 0 : index
    %38 = vector.load %arg8[%c0_15, %c0_16, %c0_17] : memref<2x16x32xf32, #tpu.memory_space<vmem>>, vector<1x16x32xf32>
    %39 = vector.shape_cast %38 : vector<1x16x32xf32> to vector<16x32xf32>
    %40 = vector.shape_cast %37 : vector<16x32xf32> to vector<1x16x32xf32>
    tpu.vector_store %arg8[%c0_15, %c0_16, %c0_17], %40 {strides = array<i32>} : memref<2x16x32xf32, #tpu.memory_space<vmem>>, vector<1x16x32xf32>,
    %c0_18 = arith.constant 0 : index
    %c0_19 = arith.constant 0 : index
    %c0_20 = arith.constant 0 : index
    %41 = vector.load %arg9[%c0_18, %c0_19, %c0_20] : memref<2x16x32xf32, #tpu.memory_space<vmem>>, vector<1x16x32xf32>
    %42 = vector.shape_cast %41 : vector<1x16x32xf32> to vector<16x32xf32>
    %43 = vector.shape_cast %35 : vector<16x32xf32> to vector<1x16x32xf32>
    tpu.vector_store %arg9[%c0_18, %c0_19, %c0_20], %43 {strides = array<i32>} : memref<2x16x32xf32, #tpu.memory_space<vmem>>, vector<1x16x32xf32>,
    %44 = arith.truncf %37 : vector<16x32xf32> to vector<16x32xbf16>
    %c0_21 = arith.constant 0 : index
    %c0_22 = arith.constant 0 : index
    %45 = vector.load %arg6[%c0_21, %c0_22] : memref<64x128xbf16, #tpu.memory_space<vmem>>, vector<64x128xbf16>
    %c0_23 = arith.constant 0 : index
    %c0_24 = arith.constant 0 : index
    %46 = vector.load %arg7[%c0_23, %c0_24] : memref<1x128xf32, #tpu.memory_space<vmem>>, vector<1x128xf32>
    %c1 = arith.constant 1 : index
    %c0_25 = arith.constant 0 : index
    %c0_26 = arith.constant 0 : index
    %47 = vector.load %arg2[%c1, %c0_25, %c0_26] : memref<2x16x32xf32, #tpu.memory_space<vmem>>, vector<1x16x32xf32>
    %48 = vector.shape_cast %47 : vector<1x16x32xf32> to vector<16x32xf32>
    %c1_27 = arith.constant 1 : index
    %c0_28 = arith.constant 0 : index
    %c0_29 = arith.constant 0 : index
    %49 = vector.load %arg3[%c1_27, %c0_28, %c0_29] : memref<2x16x32xf32, #tpu.memory_space<vmem>>, vector<1x16x32xf32>
    %50 = vector.shape_cast %49 : vector<1x16x32xf32> to vector<16x32xf32>
    %51 = arith.truncf %48 : vector<16x32xf32> to vector<16x32xbf16>
    %52 = tpu.concatenate %44, %51 in 1 : vector<16x32xbf16>, vector<16x32xbf16> -> vector<16x64xbf16>
    %cst_30 = arith.constant dense<0.000000e+00> : vector<16x128xf32>
    %53 = tpu.matmul %52, %45, %cst_30 {dimension_numbers = #tpu.dot_dimension_numbers<[1], [0], [0], [1], [0, 0, 1, 1], [], []>} : vector<16x64xbf16>, vector<64x128xbf16>, vector<16x128xf32> -> vector<16x128xf32>
    %54 = vector.broadcast %46 : vector<1x128xf32> to vector<16x128xf32>
    %55 = arith.addf %53, %54 : vector<16x128xf32>
    %56 = arith.mulf %55, %8 : vector<16x128xf32>
    %57 = math.tanh %56 : vector<16x128xf32>
    %cst_31 = arith.constant 5.000000e-01 : f32
    %58 = vector.broadcast %cst_31 : f32 to vector<16x128xf32>
    %59 = arith.mulf %58, %57 : vector<16x128xf32>
    %cst_32 = arith.constant 5.000000e-01 : f32
    %60 = vector.broadcast %cst_32 : f32 to vector<16x128xf32>
    %61 = arith.addf %59, %60 : vector<16x128xf32>
    %62 = arith.select %5, %57, %61 : vector<16x128xi1>, vector<16x128xf32>
    %63 = vector.extract_strided_slice %62 {offsets = [0, 0], sizes = [16, 32], strides = [1, 1]} : vector<16x128xf32> to vector<16x32xf32>
    %64 = vector.extract_strided_slice %62 {offsets = [0, 32], sizes = [16, 32], strides = [1, 1]} : vector<16x128xf32> to vector<16x32xf32>
    %65 = vector.extract_strided_slice %62 {offsets = [0, 64], sizes = [16, 32], strides = [1, 1]} : vector<16x128xf32> to vector<16x32xf32>
    %66 = vector.extract_strided_slice %62 {offsets = [0, 96], sizes = [16, 32], strides = [1, 1]} : vector<16x128xf32> to vector<16x32xf32>
    %67 = arith.mulf %64, %50 : vector<16x32xf32>
    %68 = arith.mulf %63, %65 : vector<16x32xf32>
    %69 = arith.addf %67, %68 : vector<16x32xf32>
    %70 = math.tanh %69 : vector<16x32xf32>
    %71 = arith.mulf %66, %70 : vector<16x32xf32>
    %c1_33 = arith.constant 1 : index
    %c0_34 = arith.constant 0 : index
    %c0_35 = arith.constant 0 : index
    %72 = vector.load %arg8[%c1_33, %c0_34, %c0_35] : memref<2x16x32xf32, #tpu.memory_space<vmem>>, vector<1x16x32xf32>
    %73 = vector.shape_cast %72 : vector<1x16x32xf32> to vector<16x32xf32>
    %74 = vector.shape_cast %71 : vector<16x32xf32> to vector<1x16x32xf32>
    tpu.vector_store %arg8[%c1_33, %c0_34, %c0_35], %74 {strides = array<i32>} : memref<2x16x32xf32, #tpu.memory_space<vmem>>, vector<1x16x32xf32>,
    %c1_36 = arith.constant 1 : index
    %c0_37 = arith.constant 0 : index
    %c0_38 = arith.constant 0 : index
    %75 = vector.load %arg9[%c1_36, %c0_37, %c0_38] : memref<2x16x32xf32, #tpu.memory_space<vmem>>, vector<1x16x32xf32>
    %76 = vector.shape_cast %75 : vector<1x16x32xf32> to vector<16x32xf32>
    %77 = vector.shape_cast %69 : vector<16x32xf32> to vector<1x16x32xf32>
    tpu.vector_store %arg9[%c1_36, %c0_37, %c0_38], %77 {strides = array<i32>} : memref<2x16x32xf32, #tpu.memory_space<vmem>>, vector<1x16x32xf32>,
    return
  }
  func.func @transform_0(%arg0: i32) -> (i32, i32) {
    %c0_i32 = arith.constant 0 : i32
    %c0_i32_0 = arith.constant 0 : i32
    return %arg0, %c0_i32 : i32, i32
  }
  func.func @transform_1(%arg0: i32) -> (i32, i32, i32) {
    %c0_i32 = arith.constant 0 : i32
    %c0_i32_0 = arith.constant 0 : i32
    %c0_i32_1 = arith.constant 0 : i32
    return %c0_i32, %arg0, %c0_i32_0 : i32, i32, i32
  }
  func.func @transform_2(%arg0: i32) -> (i32, i32, i32) {
    %c0_i32 = arith.constant 0 : i32
    %c0_i32_0 = arith.constant 0 : i32
    %c0_i32_1 = arith.constant 0 : i32
    return %c0_i32, %arg0, %c0_i32_0 : i32, i32, i32
  }
  func.func @transform_3(%arg0: i32) -> (i32, i32) {
    %c0_i32 = arith.constant 0 : i32
    %c0_i32_0 = arith.constant 0 : i32
    %c0_i32_1 = arith.constant 0 : i32
    return %c0_i32, %c0_i32_0 : i32, i32
  }
  func.func @transform_4(%arg0: i32) -> (i32, i32) {
    %c0_i32 = arith.constant 0 : i32
    %c0_i32_0 = arith.constant 0 : i32
    %c0_i32_1 = arith.constant 0 : i32
    return %c0_i32, %c0_i32_0 : i32, i32
  }
  func.func @transform_5(%arg0: i32) -> (i32, i32) {
    %c0_i32 = arith.constant 0 : i32
    %c0_i32_0 = arith.constant 0 : i32
    %c0_i32_1 = arith.constant 0 : i32
    return %c0_i32, %c0_i32_0 : i32, i32
  }
  func.func @transform_6(%arg0: i32) -> (i32, i32) {
    %c0_i32 = arith.constant 0 : i32
    %c0_i32_0 = arith.constant 0 : i32
    %c0_i32_1 = arith.constant 0 : i32
    return %c0_i32, %c0_i32_0 : i32, i32
  }
  func.func @transform_7(%arg0: i32) -> (i32, i32, i32) {
    %c0_i32 = arith.constant 0 : i32
    %c0_i32_0 = arith.constant 0 : i32
    %c0_i32_1 = arith.constant 0 : i32
    return %c0_i32, %arg0, %c0_i32_0 : i32, i32, i32
  }
  func.func @transform_8(%arg0: i32) -> (i32, i32, i32) {
    %c0_i32 = arith.constant 0 : i32
    %c0_i32_0 = arith.constant 0 : i32
    %c0_i32_1 = arith.constant 0 : i32
    return %c0_i32, %arg0, %c0_i32_0 : i32, i32, i32
  }
}

</mosaic_0001>

<llo_original>
// kernel: tpu_custom_call.1
$region0: #{tpu_custom_call.1}
  #allocation0 [shape = 'u32[]', space=smem, size = 0x4, offset = 0x4, fixed_abs, tag = 'smem constant byte address 0x4 - core index']
  #allocation1 [shape = 'u32[144,128]{1,0:T(1,128)}', space=vmem, size = 0x12000, scoped, tag = 'internal scratch']
  %s0 = inlined_call_operand.hbm [shape: f32[16,64], index: 0, kind: input, shape index: {}]
  %s1 = inlined_call_operand.hbm [shape: f32[2,16,32], index: 1, kind: input, shape index: {}]
  %s2 = inlined_call_operand.hbm [shape: f32[2,16,32], index: 2, kind: input, shape index: {}]
  %s3 = inlined_call_operand.hbm [shape: bf16[96,128], index: 3, kind: input, shape index: {}]
  %s4 = inlined_call_operand.vmem [shape: f32[1,128], index: 4, kind: input, shape index: {}]
  %s5 = inlined_call_operand.hbm [shape: bf16[64,128], index: 5, kind: input, shape index: {}]
  %s6 = inlined_call_operand.vmem [shape: f32[1,128], index: 6, kind: input, shape index: {}]
  %s7 = inlined_call_operand.hbm [shape: f32[2,16,32], index: 7, kind: output, shape index: {0}]
  %s8 = inlined_call_operand.hbm [shape: f32[2,16,32], index: 8, kind: output, shape index: {1}]
  %9 = xla_tuple %s7, %s8
  %s10 = sld [smem:[#allocation0]]
  $region66: #{tpu_custom_call.1} parent=0
    _
  %s12 = ssub.s32 1, %s10
  %s13 = scalar_select 0, %s12, %s10
  $region1: #{tpu_custom_call.1} parent=0
    #allocation2 [shape = 'u8[8192]{0}', space=vmem, size = 0x2000, scoped, tag = 'input window, operand 0, single buffered']
    #allocation3 [shape = 's32[1]{0}', space=sflag, size = 0x4, scoped, tag = 'scoped memory for tpu_custom_call.1']
    #allocation4 [shape = 's32[1]{0}', space=sflag, size = 0x4, scoped, tag = 'scoped memory for tpu_custom_call.1']
    #allocation5 [shape = 'u8[16384]{0}', space=vmem, size = 0x4000, scoped, tag = 'input window, operand 1, single buffered']
    #allocation6 [shape = 's32[1]{0}', space=sflag, size = 0x4, scoped, tag = 'scoped memory for tpu_custom_call.1']
    #allocation7 [shape = 'u8[16384]{0}', space=vmem, size = 0x4000, scoped, tag = 'input window, operand 2, single buffered']
    #allocation8 [shape = 'u8[24576]{0}', space=vmem, size = 0x6000, scoped, tag = 'input window, operand 3, single buffered']
    #allocation9 [shape = 's32[1]{0}', space=sflag, size = 0x4, scoped, tag = 'scoped memory for tpu_custom_call.1']
    #allocation10 [shape = 'u8[16384]{0}', space=vmem, size = 0x4000, scoped, tag = 'input window, operand 5, single buffered']
    #allocation11 [shape = 'u8[16384]{0}', space=vmem, size = 0x4000, scoped, tag = 'output window, operand 0, single buffered']
    #allocation12 [shape = 'u8[16384]{0}', space=vmem, size = 0x4000, scoped, tag = 'output window, operand 1, single buffered']
    #allocation13 [shape = 's32[1]{0}', space=sflag, size = 0x4, scoped, tag = 'scoped memory for tpu_custom_call.1']
    %14 = vsyncpa [#allocation3], 0
    %15 = vsyncpa [#allocation6], 0
    %16 = vsyncpa [#allocation9], 0
    %17 = vsyncpa [#allocation4], 0
    %18 = vsyncpa [#allocation13], 0
    // Predicated region
    $region2: #{tpu_custom_call.1} parent=1 // pred_check
      _
    $region3: #{tpu_custom_call.1} parent=1 // pred_check_branch
      %20 = sbr.rel (0) target = $region5
    $region4: #{tpu_custom_call.1} parent=1 // pred_region
      %s22 = ssub.s32 256, 256
      %23 = vsyncadd [#allocation3], %s22
      %s24 = sshll.u32 [#allocation2], 4
      %s25 = int_to_ptr.vmem [resolvable:$true] %s24
      %30 = dma.hbm_to_vmem [thread:$0]  %s0, 256, %s25, [#allocation3], 128, 128, 8
    $region5: #{tpu_custom_call.1} parent=1 // pred_fallthru
      _
    // Predicated region
    $region6: #{tpu_custom_call.1} parent=1 // pred_check
      _
    $region7: #{tpu_custom_call.1} parent=1 // pred_check_branch
      %32 = sbr.rel (0) target = $region9
    $region8: #{tpu_custom_call.1} parent=1 // pred_region
      %s34 = ssub.s32 512, 512
      %35 = vsyncadd [#allocation6], %s34
      %s36 = sshll.u32 [#allocation5], 4
      %s37 = int_to_ptr.vmem [resolvable:$true] %s36
      %42 = dma.hbm_to_vmem [thread:$0]  %s1, 512, %s37, [#allocation6], 128, 128, 8
    $region9: #{tpu_custom_call.1} parent=1 // pred_fallthru
      _
    // Predicated region
    $region10: #{tpu_custom_call.1} parent=1 // pred_check
      _
    $region11: #{tpu_custom_call.1} parent=1 // pred_check_branch
      %44 = sbr.rel (0) target = $region13
    $region12: #{tpu_custom_call.1} parent=1 // pred_region
      %s46 = ssub.s32 512, 512
      %47 = vsyncadd [#allocation6], %s46
      %s48 = sshll.u32 [#allocation7], 4
      %s49 = int_to_ptr.vmem [resolvable:$true] %s48
      %54 = dma.hbm_to_vmem [thread:$0]  %s2, 512, %s49, [#allocation6], 128, 128, 8
    $region13: #{tpu_custom_call.1} parent=1 // pred_fallthru
      _
    // Predicated region
    $region14: #{tpu_custom_call.1} parent=1 // pred_check
      _
    $region15: #{tpu_custom_call.1} parent=1 // pred_check_branch
      %56 = sbr.rel (0) target = $region17
    $region16: #{tpu_custom_call.1} parent=1 // pred_region
      %s58 = ssub.s32 768, 768
      %59 = vsyncadd [#allocation9], %s58
      %s60 = sshll.u32 [#allocation8], 4
      %s61 = int_to_ptr.vmem [resolvable:$true] %s60
      %66 = dma.hbm_to_vmem [thread:$0]  %s3, 768, %s61, [#allocation9], 64, 64, 4
    $region17: #{tpu_custom_call.1} parent=1 // pred_fallthru
      _
    // Predicated region
    $region18: #{tpu_custom_call.1} parent=1 // pred_check
      _
    $region19: #{tpu_custom_call.1} parent=1 // pred_check_branch
      %68 = sbr.rel (0) target = $region21
    $region20: #{tpu_custom_call.1} parent=1 // pred_region
      _
    $region21: #{tpu_custom_call.1} parent=1 // pred_fallthru
      _
    // Predicated region
    $region22: #{tpu_custom_call.1} parent=1 // pred_check
      _
    $region23: #{tpu_custom_call.1} parent=1 // pred_check_branch
      %70 = sbr.rel (0) target = $region25
    $region24: #{tpu_custom_call.1} parent=1 // pred_region
      %s72 = ssub.s32 512, 512
      %73 = vsyncadd [#allocation9], %s72
      %s74 = sshll.u32 [#allocation10], 4
      %s75 = int_to_ptr.vmem [resolvable:$true] %s74
      %80 = dma.hbm_to_vmem [thread:$0]  %s5, 512, %s75, [#allocation9], 64, 64, 4
    $region25: #{tpu_custom_call.1} parent=1 // pred_fallthru
      _
    // Predicated region
    $region26: #{tpu_custom_call.1} parent=1 // pred_check
      _
    $region27: #{tpu_custom_call.1} parent=1 // pred_check_branch
      %82 = sbr.rel (0) target = $region29
    $region28: #{tpu_custom_call.1} parent=1 // pred_region
      _
    $region29: #{tpu_custom_call.1} parent=1 // pred_fallthru
      _
    // Predicated region
    $region30: #{tpu_custom_call.1} parent=1 // pred_check
      _
    $region31: #{tpu_custom_call.1} parent=1 // pred_check_branch
      %84 = sbr.rel (0) target = $region33
    $region32: #{tpu_custom_call.1} parent=1 // pred_region
      %85 = dma.done [#allocation3], 256
    $region33: #{tpu_custom_call.1} parent=1 // pred_fallthru
      _
    // Predicated region
    $region34: #{tpu_custom_call.1} parent=1 // pred_check
      _
    $region35: #{tpu_custom_call.1} parent=1 // pred_check_branch
      %87 = sbr.rel (0) target = $region37
    $region36: #{tpu_custom_call.1} parent=1 // pred_region
      %88 = dma.done [#allocation6], 512
    $region37: #{tpu_custom_call.1} parent=1 // pred_fallthru
      _
    // Predicated region
    $region38: #{tpu_custom_call.1} parent=1 // pred_check
      _
    $region39: #{tpu_custom_call.1} parent=1 // pred_check_branch
      %90 = sbr.rel (0) target = $region41
    $region40: #{tpu_custom_call.1} parent=1 // pred_region
      %91 = dma.done [#allocation6], 512
    $region41: #{tpu_custom_call.1} parent=1 // pred_fallthru
      _
    // Predicated region
    $region42: #{tpu_custom_call.1} parent=1 // pred_check
      _
    $region43: #{tpu_custom_call.1} parent=1 // pred_check_branch
      %93 = sbr.rel (0) target = $region45
    $region44: #{tpu_custom_call.1} parent=1 // pred_region
      %94 = dma.done [#allocation9], 768
    $region45: #{tpu_custom_call.1} parent=1 // pred_fallthru
      _
    // Predicated region
    $region46: #{tpu_custom_call.1} parent=1 // pred_check
      _
    $region47: #{tpu_custom_call.1} parent=1 // pred_check_branch
      %96 = sbr.rel (0) target = $region49
    $region48: #{tpu_custom_call.1} parent=1 // pred_region
      %97 = dma.done [#allocation9], 512
    $region49: #{tpu_custom_call.1} parent=1 // pred_fallthru
      _
    %v99 = vlaneseq
    %v100 = vand.u32 %v99, 127
    %vm101 = vcmp.ge.s32.totalorder %v100, 64
    %vm102 = vcmp.lt.s32.totalorder %v100, 96
    %vm103 = vmand %vm101, %vm102
    %v104 = vsel %vm103, 1.0, 0.5
    %v105 = vld [vmem:[#allocation2] sm:$0xff]
    %v106 = vld [vmem:[#allocation2 + $0x8] sm:$0xff]
    %v107 = vpack.c.bf16 %v106, %v105
    %v108 = vld [vmem:[#allocation8] sm:$0xf]
    %v109 = vld [vmem:[#allocation8 + $0x4] sm:$0xf]
    %v110 = vld [vmem:[#allocation8 + $0x8] sm:$0xf]
    %v111 = vld [vmem:[#allocation8 + $0xc] sm:$0xf]
    %v112 = vld [vmem:[#allocation8 + $0x10] sm:$0xf]
    %v113 = vld [vmem:[#allocation8 + $0x14] sm:$0xf]
    %v114 = vld [vmem:[#allocation8 + $0x18] sm:$0xf]
    %v115 = vld [vmem:[#allocation8 + $0x1c] sm:$0xf]
    %v116 = vld [vmem:[#allocation8 + $0x20] sm:$0xf]
    %v117 = vld [vmem:[#allocation8 + $0x24] sm:$0xf]
    %v118 = vld [vmem:[#allocation8 + $0x28] sm:$0xf]
    %v119 = vld [vmem:[#allocation8 + $0x2c] sm:$0xf]
    %v120 = vld [vmem:[%s4] sm:$0x1]
    %v121 = vld [vmem:[#allocation5] sm:$0xff]
    %v122 = vld [vmem:[#allocation5 + $0x8] sm:$0xff]
    %v123 = vld [vmem:[#allocation7] sm:$0xff]
    %v124 = vld [vmem:[#allocation7 + $0x8] sm:$0xff]
    %v125 = vpack.c.bf16 %v122, %v121
    %127 = vrot.lane.b32.xlu0 %v125, 64
    %v128 = vpop.permute.xlu0 %127
    %vm129 = vcmask 523264
    %v132 = vsel %vm129, %v107, %v128
    %v134 = vlaneseq
    %v135 = vshrl.u32 %v134, 7
    %v136 = vsub.s32 0, %v135
    %v137 = vrot.slane %v120, %v136
    %v151 = vunpack.c.l.b16 %v108
    %v152 = vunpack.c.l.b16 %v109
    %v153 = vunpack.c.l.b16 %v110
    %v154 = vunpack.c.l.b16 %v111
    %v155 = vunpack.c.l.b16 %v112
    %v156 = vunpack.c.l.b16 %v113
    %v157 = vunpack.c.l.b16 %v114
    %v158 = vunpack.c.l.b16 %v115
    %v159 = vunpack.c.l.b16 %v116
    %v160 = vunpack.c.l.b16 %v117
    %v161 = vunpack.c.l.b16 %v118
    %v162 = vunpack.c.l.b16 %v119
    %v163 = vpack.c.b16 %v152, %v151
    %v164 = vpack.c.b16 %v154, %v153
    %v165 = vpack.c.b16 %v156, %v155
    %v166 = vpack.c.b16 %v158, %v157
    %v167 = vpack.c.b16 %v160, %v159
    %v168 = vpack.c.b16 %v162, %v161
    %vm175 = vcmask 785408
    %v176 = vsel %vm175, %v132, 0
    %178 = vmatprep.subr.bf16.mxu0 0
    %179 = vmatpush1.bf16.msra.mxu0 %v163
    %180 = vmatprep.subr.bf16.mxu0 0
    %181 = vmatpush1.bf16.msra.mxu0 %v164
    %182 = vmatprep.subr.bf16.mxu0 0
    %183 = vmatpush1.bf16.msra.mxu0 %v165
    %184 = vmatprep.subr.bf16.mxu0 0
    %185 = vmatpush1.bf16.msra.mxu0 %v166
    %186 = vmatprep.subr.bf16.mxu0 0
    %187 = vmatpush1.bf16.msra.mxu0 %v167
    %188 = vmatprep.subr.bf16.mxu0 0
    %189 = vmatpush1.bf16.msra.mxu0 %v168
    %190 = vmatprep.subr.bf16.mxu0 0
    %191 = vmatpush1.bf16.msra.mxu0 0
    %192 = vmatprep.subr.bf16.mxu0 0
    %193 = vmatpush1.bf16.msra.mxu0 0
    %194 = vmatprep.subr.bf16.mxu0 0
    %195 = vmatpush1.bf16.msra.mxu0 0
    %196 = vmatprep.subr.bf16.mxu0 0
    %197 = vmatpush1.bf16.msra.mxu0 0
    %198 = vmatprep.subr.bf16.mxu0 0
    %199 = vmatpush1.bf16.msra.mxu0 0
    %200 = vmatprep.subr.bf16.mxu0 0
    %201 = vmatpush1.bf16.msra.mxu0 0
    %202 = vmatprep.subr.bf16.mxu0 0
    %203 = vmatpush1.bf16.msra.mxu0 0
    %204 = vmatprep.subr.bf16.mxu0 0
    %205 = vmatpush1.bf16.msra.mxu0 0
    %206 = vmatprep.subr.bf16.mxu0 0
    %207 = vmatpush1.bf16.msra.mxu0 0
    %208 = vmatprep.subr.bf16.mxu0 0
    %209 = vmatpush1.bf16.msra.mxu0 0
    %210 = vmatprep.mubr.bf16.mxu0 0
    %211 = vmatmul.mubr.bf16.gmra.mrb[0].mxu0 %v176
    %v212 = vpop.f32.mrb[0].mxu0
    %v213 = vadd.f32 %v137, %v212
    %v214 = vpop.f32.mrb[0].mxu0
    %v215 = vpop.f32.mrb[0].mxu0
    %v216 = vadd.f32 %v137, %v215
    %v217 = vpop.f32.mrb[0].mxu0
    %218 = vdwg.mxu0
    %v219 = vmul.f32 %v213, %v104
    %v220 = vmul.f32 %v216, %v104
    %v221 = vtanh.pop %v219
    %v222 = vtanh.pop %v220
    %v223 = vmul.f32 %v221, 0.5
    %v224 = vmul.f32 %v222, 0.5
    %v225 = vadd.f32 %v223, 0.5
    %v226 = vadd.f32 %v224, 0.5
    %v227 = vsel %vm103, %v221, %v225
    %v228 = vsel %vm103, %v222, %v226
    %231 = vrot.lane.b32.xlu0 %v123, 32
    %v232 = vpop.permute.xlu0 %231
    %233 = vrot.lane.b32.xlu0 %v124, 32
    %v234 = vpop.permute.xlu0 %233
    %v237 = vmul.f32 %v227, %v232
    %v238 = vmul.f32 %v228, %v234
    %241 = vrot.lane.b32.xlu0 %v227, 64
    %v242 = vpop.permute.xlu0 %241
    %243 = vrot.lane.b32.xlu0 %v228, 64
    %v244 = vpop.permute.xlu0 %243
    %v247 = vmul.f32 %v227, %v242
    %v248 = vmul.f32 %v228, %v244
    %251 = vrot.lane.b32.xlu0 %v247, 32
    %v252 = vpop.permute.xlu0 %251
    %253 = vrot.lane.b32.xlu0 %v248, 32
    %v254 = vpop.permute.xlu0 %253
    %v257 = vadd.f32 %v237, %v252
    %v258 = vadd.f32 %v238, %v254
    %v259 = vtanh.pop %v257
    %v260 = vtanh.pop %v258
    %263 = vrot.lane.b32.xlu0 %v259, 64
    %v264 = vpop.permute.xlu0 %263
    %265 = vrot.lane.b32.xlu0 %v260, 64
    %v266 = vpop.permute.xlu0 %265
    %v269 = vmul.f32 %v227, %v264
    %v270 = vmul.f32 %v228, %v266
    %273 = vrot.lane.b32.xlu0 %v269, 32
    %v274 = vpop.permute.xlu0 %273
    %275 = vrot.lane.b32.xlu0 %v270, 32
    %v276 = vpop.permute.xlu0 %275
    %vm279 = vcmask 261120
    %280 = vst.msk [vmem:[#allocation11] sm:$0xff] %vm279, %v274
    %281 = vst.msk [vmem:[#allocation11 + $0x8] sm:$0xff] %vm279, %v276
    %284 = vrot.lane.b32.xlu0 %v257, 96
    %v285 = vpop.permute.xlu0 %284
    %286 = vrot.lane.b32.xlu0 %v258, 96
    %v287 = vpop.permute.xlu0 %286
    %290 = vst.msk [vmem:[#allocation12] sm:$0xff] %vm279, %v285
    %291 = vst.msk [vmem:[#allocation12 + $0x8] sm:$0xff] %vm279, %v287
    %v292 = vpack.c.bf16 %v270, %v269
    %v293 = vld [vmem:[#allocation10] sm:$0xf]
    %v294 = vld [vmem:[#allocation10 + $0x4] sm:$0xf]
    %v295 = vld [vmem:[#allocation10 + $0x8] sm:$0xf]
    %v296 = vld [vmem:[#allocation10 + $0xc] sm:$0xf]
    %v297 = vld [vmem:[#allocation10 + $0x10] sm:$0xf]
    %v298 = vld [vmem:[#allocation10 + $0x14] sm:$0xf]
    %v299 = vld [vmem:[#allocation10 + $0x18] sm:$0xf]
    %v300 = vld [vmem:[#allocation10 + $0x1c] sm:$0xf]
    %v301 = vld [vmem:[%s6] sm:$0x1]
    %s302 = scalar_lea.vmem [#allocation5], 16
    %v303 = vld [vmem:[%s302] sm:$0xff]
    %v304 = vld [vmem:[%s302 + $0x8] sm:$0xff]
    %s305 = scalar_lea.vmem [#allocation7], 16
    %v306 = vld [vmem:[%s305] sm:$0xff]
    %v307 = vld [vmem:[%s305 + $0x8] sm:$0xff]
    %v308 = vpack.c.bf16 %v304, %v303
    %310 = vrot.lane.b32.xlu0 %v292, 32
    %v311 = vpop.permute.xlu0 %310
    %313 = vrot.lane.b32.xlu0 %v308, 32
    %v314 = vpop.permute.xlu0 %313
    %v317 = vsel %vm279, %v311, %v314
    %v319 = vlaneseq
    %v320 = vshrl.u32 %v319, 7
    %v321 = vsub.s32 0, %v320
    %v322 = vrot.slane %v301, %v321
    %v332 = vunpack.c.l.b16 %v293
    %v333 = vunpack.c.l.b16 %v294
    %v334 = vunpack.c.l.b16 %v295
    %v335 = vunpack.c.l.b16 %v296
    %v336 = vunpack.c.l.b16 %v297
    %v337 = vunpack.c.l.b16 %v298
    %v338 = vunpack.c.l.b16 %v299
    %v339 = vunpack.c.l.b16 %v300
    %v340 = vpack.c.b16 %v333, %v332
    %v341 = vpack.c.b16 %v335, %v334
    %v342 = vpack.c.b16 %v337, %v336
    %v343 = vpack.c.b16 %v339, %v338
    %v348 = vsel %vm129, %v317, 0
    %350 = vmatprep.subr.bf16.mxu0 0
    %351 = vmatpush1.bf16.msra.mxu0 %v340
    %352 = vmatprep.subr.bf16.mxu0 0
    %353 = vmatpush1.bf16.msra.mxu0 %v341
    %354 = vmatprep.subr.bf16.mxu0 0
    %355 = vmatpush1.bf16.msra.mxu0 %v342
    %356 = vmatprep.subr.bf16.mxu0 0
    %357 = vmatpush1.bf16.msra.mxu0 %v343
    %358 = vmatprep.subr.bf16.mxu0 0
    %359 = vmatpush1.bf16.msra.mxu0 0
    %360 = vmatprep.subr.bf16.mxu0 0
    %361 = vmatpush1.bf16.msra.mxu0 0
    %362 = vmatprep.subr.bf16.mxu0 0
    %363 = vmatpush1.bf16.msra.mxu0 0
    %364 = vmatprep.subr.bf16.mxu0 0
    %365 = vmatpush1.bf16.msra.mxu0 0
    %366 = vmatprep.subr.bf16.mxu0 0
    %367 = vmatpush1.bf16.msra.mxu0 0
    %368 = vmatprep.subr.bf16.mxu0 0
    %369 = vmatpush1.bf16.msra.mxu0 0
    %370 = vmatprep.subr.bf16.mxu0 0
    %371 = vmatpush1.bf16.msra.mxu0 0
    %372 = vmatprep.subr.bf16.mxu0 0
    %373 = vmatpush1.bf16.msra.mxu0 0
    %374 = vmatprep.subr.bf16.mxu0 0
    %375 = vmatpush1.bf16.msra.mxu0 0
    %376 = vmatprep.subr.bf16.mxu0 0
    %377 = vmatpush1.bf16.msra.mxu0 0
    %378 = vmatprep.subr.bf16.mxu0 0
    %379 = vmatpush1.bf16.msra.mxu0 0
    %380 = vmatprep.subr.bf16.mxu0 0
    %381 = vmatpush1.bf16.msra.mxu0 0
    %382 = vmatprep.mubr.bf16.mxu0 0
    %383 = vmatmul.mubr.bf16.gmra.mrb[0].mxu0 %v348
    %v384 = vpop.f32.mrb[0].mxu0
    %v385 = vadd.f32 %v322, %v384
    %v386 = vpop.f32.mrb[0].mxu0
    %v387 = vpop.f32.mrb[0].mxu0
    %v388 = vadd.f32 %v322, %v387
    %v389 = vpop.f32.mrb[0].mxu0
    %390 = vdwg.mxu0
    %v391 = vmul.f32 %v385, %v104
    %v392 = vmul.f32 %v388, %v104
    %v393 = vtanh.pop %v391
    %v394 = vtanh.pop %v392
    %v395 = vmul.f32 %v393, 0.5
    %v396 = vmul.f32 %v394, 0.5
    %v397 = vadd.f32 %v395, 0.5
    %v398 = vadd.f32 %v396, 0.5
    %v399 = vsel %vm103, %v393, %v397
    %v400 = vsel %vm103, %v394, %v398
    %403 = vrot.lane.b32.xlu0 %v306, 32
    %v404 = vpop.permute.xlu0 %403
    %405 = vrot.lane.b32.xlu0 %v307, 32
    %v406 = vpop.permute.xlu0 %405
    %v409 = vmul.f32 %v399, %v404
    %v410 = vmul.f32 %v400, %v406
    %413 = vrot.lane.b32.xlu0 %v399, 64
    %v414 = vpop.permute.xlu0 %413
    %415 = vrot.lane.b32.xlu0 %v400, 64
    %v416 = vpop.permute.xlu0 %415
    %v419 = vmul.f32 %v399, %v414
    %v420 = vmul.f32 %v400, %v416
    %423 = vrot.lane.b32.xlu0 %v419, 32
    %v424 = vpop.permute.xlu0 %423
    %425 = vrot.lane.b32.xlu0 %v420, 32
    %v426 = vpop.permute.xlu0 %425
    %v429 = vadd.f32 %v409, %v424
    %v430 = vadd.f32 %v410, %v426
    %v431 = vtanh.pop %v429
    %v432 = vtanh.pop %v430
    %435 = vrot.lane.b32.xlu0 %v431, 64
    %v436 = vpop.permute.xlu0 %435
    %437 = vrot.lane.b32.xlu0 %v432, 64
    %v438 = vpop.permute.xlu0 %437
    %v441 = vmul.f32 %v399, %v436
    %v442 = vmul.f32 %v400, %v438
    %445 = vrot.lane.b32.xlu0 %v441, 32
    %v446 = vpop.permute.xlu0 %445
    %447 = vrot.lane.b32.xlu0 %v442, 32
    %v448 = vpop.permute.xlu0 %447
    %s451 = scalar_lea.vmem [#allocation11], 16
    %452 = vst.msk [vmem:[%s451] sm:$0xff] %vm279, %v446
    %453 = vst.msk [vmem:[%s451 + $0x8] sm:$0xff] %vm279, %v448
    %456 = vrot.lane.b32.xlu0 %v429, 96
    %v457 = vpop.permute.xlu0 %456
    %458 = vrot.lane.b32.xlu0 %v430, 96
    %v459 = vpop.permute.xlu0 %458
    %s462 = scalar_lea.vmem [#allocation12], 16
    %463 = vst.msk [vmem:[%s462] sm:$0xff] %vm279, %v457
    %464 = vst.msk [vmem:[%s462 + $0x8] sm:$0xff] %vm279, %v459
    // Predicated region
    $region50: #{tpu_custom_call.1} parent=1 // pred_check
      _
    $region51: #{tpu_custom_call.1} parent=1 // pred_check_branch
      %466 = sbr.rel (0) target = $region53
    $region52: #{tpu_custom_call.1} parent=1 // pred_region
      %s468 = ssub.s32 512, 512
      %469 = vsyncadd [#allocation4], %s468
      %s470 = sshll.u32 [#allocation11], 4
      %s471 = int_to_ptr.vmem [resolvable:$true] %s470
      %476 = dma.vmem_to_hbm [thread:$0]  %s471, 512, %s7, [#allocation4], 128, 128, 8
    $region53: #{tpu_custom_call.1} parent=1 // pred_fallthru
      _
    // Predicated region
    $region54: #{tpu_custom_call.1} parent=1 // pred_check
      _
    $region55: #{tpu_custom_call.1} parent=1 // pred_check_branch
      %478 = sbr.rel (0) target = $region57
    $region56: #{tpu_custom_call.1} parent=1 // pred_region
      %s480 = ssub.s32 512, 512
      %481 = vsyncadd [#allocation13], %s480
      %s482 = sshll.u32 [#allocation12], 4
      %s483 = int_to_ptr.vmem [resolvable:$true] %s482
      %488 = dma.vmem_to_hbm [thread:$0]  %s483, 512, %s8, [#allocation13], 128, 128, 8
    $region57: #{tpu_custom_call.1} parent=1 // pred_fallthru
      _
    // Predicated region
    $region58: #{tpu_custom_call.1} parent=1 // pred_check
      _
    $region59: #{tpu_custom_call.1} parent=1 // pred_check_branch
      %490 = sbr.rel (0) target = $region61
    $region60: #{tpu_custom_call.1} parent=1 // pred_region
      %491 = dma.done [#allocation4], 512
    $region61: #{tpu_custom_call.1} parent=1 // pred_fallthru
      _
    // Predicated region
    $region62: #{tpu_custom_call.1} parent=1 // pred_check
      _
    $region63: #{tpu_custom_call.1} parent=1 // pred_check_branch
      %493 = sbr.rel (0) target = $region65
    $region64: #{tpu_custom_call.1} parent=1 // pred_region
      %494 = dma.done [#allocation13], 512
    $region65: #{tpu_custom_call.1} parent=1 // pred_fallthru
      _
    %495 = vsyncpa [#allocation3], 1
    %496 = vsyncpa [#allocation6], 1
    %497 = vsyncpa [#allocation9], 1
    %498 = vsyncpa [#allocation4], 1
    %499 = vsyncpa [#allocation13], 1

</llo_original>
